<compile_context>
chip_gen: v7x
topology: tpu7x:2x2x1
jax: 0.10.0
libtpu: 0.0.40
codegen_flags: <defaults>
</compile_context>

<pallas_src>
import functools

import jax
import jax.numpy as jnp
from jax.experimental import pallas as pl
from jax.experimental.pallas import tpu as pltpu


def _round_up(x, m):
    return (x + m - 1) // m * m


def classifier_kernel(x_ref, w_ref, b_ref, o_ref, acc_ref):
    """One (TILE_B, TILE_K) x (TILE_K, C_pad) partial matmul + fused log-softmax."""
    k = pl.program_id(1)

    @pl.when(k == 0)
    def _init():
        acc_ref[...] = jnp.zeros_like(acc_ref)

    # MXU matmul with f32 accumulation (inputs are bf16).
    acc_ref[...] += jnp.dot(x_ref[...], w_ref[...],
                            preferred_element_type=jnp.float32)

    @pl.when(k == pl.num_programs(1) - 1)
    def _finalize():
        logits = acc_ref[...] + b_ref[...]          # bias broadcast (1, C_pad)
        # Numerically stable log-softmax along the class axis (torch dim=1).
        m = jnp.max(logits, axis=-1, keepdims=True)      # XLU
        shifted = logits - m
        lse = jnp.log(jnp.sum(jnp.exp(shifted), axis=-1, keepdims=True))  # EUP+XLU
        o_ref[...] = (shifted - lse).astype(o_ref.dtype)


@functools.partial(jax.jit, static_argnames=("tile_b", "tile_k"))
def classifier_forward(x, w_t, b, *, tile_b=512, tile_k=512):
    """x: (B, D), w_t: (D, C) (pre-transposed torch weight), b: (1, C) or (C,).

    Returns (B, C) log-probabilities (float32 math, output dtype follows x).
    """
    B, D = x.shape
    C = w_t.shape[1]
    out_dtype = x.dtype
    compute_dtype = jnp.bfloat16  # MXU operand dtype (f32 accumulation kept)

    # ---- tile / padding choices --------------------------------------------
    C_pad = _round_up(C, 128)                    # lane-dense class axis
    TILE_B = min(tile_b, _round_up(B, 8))        # sublane-aligned batch tile
    B_pad = _round_up(B, TILE_B)
    if D <= tile_k:
        TILE_K = D                               # whole reduction in one shot
        D_pad = D
    else:
        TILE_K = tile_k                          # multiple of 128
        D_pad = _round_up(D, TILE_K)

    # ---- pad operands -------------------------------------------------------
    x_p = jnp.zeros((B_pad, D_pad), compute_dtype).at[:B, :D].set(
        x.astype(compute_dtype))
    w_p = jnp.zeros((D_pad, C_pad), compute_dtype).at[:D, :C].set(
        w_t.astype(compute_dtype))
    # Padded classes get a huge negative bias so they never affect the softmax.
    b_p = jnp.full((1, C_pad), -1e30, jnp.float32).at[:, :C].set(
        b.astype(jnp.float32).reshape(1, C))

    grid = (B_pad // TILE_B, D_pad // TILE_K)
    itemsize = jnp.dtype(compute_dtype).itemsize

    out = pl.pallas_call(
        classifier_kernel,
        out_shape=jax.ShapeDtypeStruct((B_pad, C_pad), jnp.float32),
        grid_spec=pltpu.PrefetchScalarGridSpec(
            num_scalar_prefetch=0,
            grid=grid,
            in_specs=[
                # x tile follows (batch, k); W tile follows (k) only; bias resident.
                pl.BlockSpec((TILE_B, TILE_K), lambda i, k: (i, k)),
                pl.BlockSpec((TILE_K, C_pad), lambda i, k: (k, 0)),
                pl.BlockSpec((1, C_pad), lambda i, k: (0, 0)),
            ],
            out_specs=pl.BlockSpec((TILE_B, C_pad), lambda i, k: (i, 0)),
            scratch_shapes=[pltpu.VMEM((TILE_B, C_pad), jnp.float32)],
        ),
        compiler_params=pltpu.CompilerParams(
            dimension_semantics=("parallel", "arbitrary")),
        cost_estimate=pl.CostEstimate(
            flops=2 * B_pad * D_pad * C_pad,
            transcendentals=2 * B_pad * C_pad,
            bytes_accessed=(B_pad * D_pad * itemsize
                            + D_pad * C_pad * itemsize
                            + C_pad * 4
                            + B_pad * C_pad * 4),
        ),
    )(x_p, w_p, b_p)

    # Drop batch / class padding.
    return out[:B, :C].astype(out_dtype)


def init_classifier_params(key, input_dim, nclass):
    """Deterministic init mirroring nn.Linear defaults (uniform +/- 1/sqrt(fan_in))."""
    kw, kb = jax.random.split(key)
    bound = 1.0 / (input_dim ** 0.5)
    # torch stores weight as (nclass, input_dim); we keep the transpose (D, C)
    w_t = jax.random.uniform(kw, (input_dim, nclass), jnp.float32, -bound, bound)
    b = jax.random.uniform(kb, (1, nclass), jnp.float32, -bound, bound)
    return w_t, b


if __name__ == "__main__":
    batch, input_dim, nclass = 8, 32, 16

    key = jax.random.PRNGKey(0)
    kx, kp = jax.random.split(key)
    x = jax.random.normal(kx, (batch, input_dim), jnp.float32)
    w_t, b = init_classifier_params(kp, input_dim, nclass)

    out = classifier_forward(x, w_t, b)
    out = jax.block_until_ready(out)
    assert out.shape == (batch, nclass)

    # Reference 1: same precision recipe (bf16 operands, f32 accumulation) -> tight tol.
    logits_bf16 = jnp.dot(x.astype(jnp.bfloat16), w_t.astype(jnp.bfloat16),
                          preferred_element_type=jnp.float32) + b
    ref_matched = jax.nn.log_softmax(logits_bf16, axis=1)
    assert jnp.allclose(out, ref_matched, atol=1e-3, rtol=1e-3), \
        "mismatch vs precision-matched reference"

    # Reference 2: full f32 PyTorch-equivalent semantics -> loose tol (bf16 operands).
    ref_f32 = jax.nn.log_softmax(x @ w_t + b, axis=1)
    assert jnp.allclose(out, ref_f32, atol=2e-2, rtol=2e-2), \
        "mismatch vs f32 reference"

    print("KERNEL_OK")
</pallas_src>

<mosaic_0001>
module attributes {stable_mosaic.version = 11 : i64} {
  func.func @classifier_kernel(%arg0: i32, %arg1: i32, %arg2: memref<8x32xbf16, #tpu.memory_space<vmem>>, %arg3: memref<32x128xbf16, #tpu.memory_space<vmem>>, %arg4: memref<1x128xf32, #tpu.memory_space<vmem>>, %arg5: memref<8x128xf32, #tpu.memory_space<vmem>>, %arg6: memref<8x128xf32, #tpu.memory_space<vmem>>) attributes {dimension_semantics = [#tpu.dimension_semantics<parallel>, #tpu.dimension_semantics<arbitrary>], iteration_bounds = array<i64: 1, 1>, scalar_prefetch = 0 : i64, scratch_operands = 1 : i64, tpu.core_type = #tpu.core_type<tc>, window_params = [{transform_indices = @transform_0, window_bounds = array<i64: 8, 32>}, {transform_indices = @transform_1, window_bounds = array<i64: 32, 128>}, {pipeline_mode = #tpu.pipeline_mode<synchronous>, transform_indices = @transform_2, window_bounds = array<i64: 1, 128>}, {transform_indices = @transform_3, window_bounds = array<i64: 8, 128>}]} {
    %c0_i32 = arith.constant 0 : i32
    %0 = arith.cmpi eq, %arg1, %c0_i32 : i32
    %1 = arith.extui %0 : i1 to i32
    %c0_i32_0 = arith.constant 0 : i32
    %2 = arith.cmpi ne, %1, %c0_i32_0 : i32
    scf.if %2 {
      %cst_10 = arith.constant 0.000000e+00 : f32
      %12 = vector.broadcast %cst_10 : f32 to vector<8x128xf32>
      %c0_11 = arith.constant 0 : index
      %c0_12 = arith.constant 0 : index
      %13 = vector.load %arg6[%c0_11, %c0_12] : memref<8x128xf32, #tpu.memory_space<vmem>>, vector<8x128xf32>
      tpu.vector_store %arg6[%c0_11, %c0_12], %12 {strides = array<i32>} : memref<8x128xf32, #tpu.memory_space<vmem>>, vector<8x128xf32>,
    } else {
    }
    %c0 = arith.constant 0 : index
    %c0_1 = arith.constant 0 : index
    %3 = vector.load %arg6[%c0, %c0_1] : memref<8x128xf32, #tpu.memory_space<vmem>>, vector<8x128xf32>
    %c0_2 = arith.constant 0 : index
    %c0_3 = arith.constant 0 : index
    %4 = vector.load %arg2[%c0_2, %c0_3] : memref<8x32xbf16, #tpu.memory_space<vmem>>, vector<8x32xbf16>
    %c0_4 = arith.constant 0 : index
    %c0_5 = arith.constant 0 : index
    %5 = vector.load %arg3[%c0_4, %c0_5] : memref<32x128xbf16, #tpu.memory_space<vmem>>, vector<32x128xbf16>
    %cst = arith.constant dense<0.000000e+00> : vector<8x128xf32>
    %6 = tpu.matmul %4, %5, %cst {dimension_numbers = #tpu.dot_dimension_numbers<[1], [0], [0], [1], [0, 0, 1, 1], [], []>} : vector<8x32xbf16>, vector<32x128xbf16>, vector<8x128xf32> -> vector<8x128xf32>
    %7 = arith.addf %3, %6 : vector<8x128xf32>
    %c0_6 = arith.constant 0 : index
    %c0_7 = arith.constant 0 : index
    %8 = vector.load %arg6[%c0_6, %c0_7] : memref<8x128xf32, #tpu.memory_space<vmem>>, vector<8x128xf32>
    tpu.vector_store %arg6[%c0_6, %c0_7], %7 {strides = array<i32>} : memref<8x128xf32, #tpu.memory_space<vmem>>, vector<8x128xf32>,
    %c0_i32_8 = arith.constant 0 : i32
    %9 = arith.cmpi eq, %arg1, %c0_i32_8 : i32
    %10 = arith.extui %9 : i1 to i32
    %c0_i32_9 = arith.constant 0 : i32
    %11 = arith.cmpi ne, %10, %c0_i32_9 : i32
    scf.if %11 {
      %c0_10 = arith.constant 0 : index
      %c0_11 = arith.constant 0 : index
      %12 = vector.load %arg6[%c0_10, %c0_11] : memref<8x128xf32, #tpu.memory_space<vmem>>, vector<8x128xf32>
      %c0_12 = arith.constant 0 : index
      %c0_13 = arith.constant 0 : index
      %13 = vector.load %arg4[%c0_12, %c0_13] : memref<1x128xf32, #tpu.memory_space<vmem>>, vector<1x128xf32>
      %14 = vector.broadcast %13 : vector<1x128xf32> to vector<8x128xf32>
      %15 = arith.addf %12, %14 : vector<8x128xf32>
      %cst_14 = arith.constant dense<0xFF800000> : vector<8xf32>
      %16 = vector.multi_reduction <maximumf>, %15, %cst_14 [1] : vector<8x128xf32> to vector<8xf32>
      %17 = vector.shape_cast %16 : vector<8xf32> to vector<8x1xf32>
      %18 = vector.broadcast %17 : vector<8x1xf32> to vector<8x128xf32>
      %19 = arith.subf %15, %18 : vector<8x128xf32>
      %20 = math.exp %19 : vector<8x128xf32>
      %cst_15 = arith.constant dense<0.000000e+00> : vector<8xf32>
      %21 = vector.multi_reduction <add>, %20, %cst_15 [1] : vector<8x128xf32> to vector<8xf32>
      %22 = vector.shape_cast %21 : vector<8xf32> to vector<8x1xf32>
      %23 = math.log %22 : vector<8x1xf32>
      %24 = vector.broadcast %23 : vector<8x1xf32> to vector<8x128xf32>
      %25 = arith.subf %19, %24 : vector<8x128xf32>
      %c0_16 = arith.constant 0 : index
      %c0_17 = arith.constant 0 : index
      %26 = vector.load %arg5[%c0_16, %c0_17] : memref<8x128xf32, #tpu.memory_space<vmem>>, vector<8x128xf32>
      tpu.vector_store %arg5[%c0_16, %c0_17], %25 {strides = array<i32>} : memref<8x128xf32, #tpu.memory_space<vmem>>, vector<8x128xf32>,
    } else {
    }
    return
  }
  func.func @transform_0(%arg0: i32, %arg1: i32) -> (i32, i32) {
    %c0_i32 = arith.constant 0 : i32
    return %arg0, %arg1 : i32, i32
  }
  func.func @transform_1(%arg0: i32, %arg1: i32) -> (i32, i32) {
    %c0_i32 = arith.constant 0 : i32
    %c0_i32_0 = arith.constant 0 : i32
    return %arg1, %c0_i32 : i32, i32
  }
  func.func @transform_2(%arg0: i32, %arg1: i32) -> (i32, i32) {
    %c0_i32 = arith.constant 0 : i32
    %c0_i32_0 = arith.constant 0 : i32
    %c0_i32_1 = arith.constant 0 : i32
    return %c0_i32, %c0_i32_0 : i32, i32
  }
  func.func @transform_3(%arg0: i32, %arg1: i32) -> (i32, i32) {
    %c0_i32 = arith.constant 0 : i32
    %c0_i32_0 = arith.constant 0 : i32
    return %arg0, %c0_i32 : i32, i32
  }
}

</mosaic_0001>

<llo_original>
// kernel: classifier_forward.1
$region0: #{classifier_forward.1}
  #allocation0 [shape = 'u32[]', space=smem, size = 0x4, offset = 0x4, fixed_abs, tag = 'smem constant byte address 0x4 - core index']
  #allocation1 [shape = 'u32[144,128]{1,0:T(1,128)}', space=vmem, size = 0x12000, scoped, tag = 'internal scratch']
  #allocation2 [shape = 'f32[8,128]{1,0:T(8,128)}', space=vmem, size = 0x1000, scoped, tag = 'scratch operand']
  %s0 = inlined_call_operand.vmem [shape: bf16[8,32], index: 0, kind: input, shape index: {}]
  %s1 = inlined_call_operand.vmem [shape: bf16[32,128], index: 1, kind: input, shape index: {}]
  %s2 = inlined_call_operand.vmem [shape: f32[1,128], index: 2, kind: input, shape index: {}]
  %s3 = inlined_call_operand.hbm [shape: f32[8,128], index: 3, kind: output, shape index: {}]
  %s4 = sld [smem:[#allocation0]]
  $region30: #{classifier_forward.1} parent=0
    _
  %s6 = ssub.s32 1, %s4
  %s7 = scalar_select 0, %s6, %s4
  $region1: #{classifier_forward.1} parent=0
    #allocation3 [shape = 'u8[4096]{0}', space=vmem, size = 0x1000, scoped, tag = 'output window, operand 0, single buffered']
    #allocation4 [shape = 's32[1]{0}', space=sflag, size = 0x4, scoped, tag = 'scoped memory for classifier_forward.1']
    %8 = vsyncpa [#allocation4], 0
    // Predicated region
    $region2: #{classifier_forward.1} parent=1 // pred_check
      _
    $region3: #{classifier_forward.1} parent=1 // pred_check_branch
      %10 = sbr.rel (0) target = $region5
    $region4: #{classifier_forward.1} parent=1 // pred_region
      _
    $region5: #{classifier_forward.1} parent=1 // pred_fallthru
      _
    // Predicated region
    $region6: #{classifier_forward.1} parent=1 // pred_check
      _
    $region7: #{classifier_forward.1} parent=1 // pred_check_branch
      %12 = sbr.rel (0) target = $region9
    $region8: #{classifier_forward.1} parent=1 // pred_region
      _
    $region9: #{classifier_forward.1} parent=1 // pred_fallthru
      _
    // Predicated region
    $region10: #{classifier_forward.1} parent=1 // pred_check
      _
    $region11: #{classifier_forward.1} parent=1 // pred_check_branch
      %14 = sbr.rel (0) target = $region13
    $region12: #{classifier_forward.1} parent=1 // pred_region
      _
    $region13: #{classifier_forward.1} parent=1 // pred_fallthru
      _
    %p16 = scmp.eq.s32.totalorder 0, 0
    // Predicated region
    $region14: #{classifier_forward.1} parent=1 // pred_check
      %p17 = pneg %p16
    $region15: #{classifier_forward.1} parent=1 // pred_check_branch
      %19 = sbr.rel (%p17) target = $region17
    $region16: #{classifier_forward.1} parent=1 // pred_region
      %20 = vst [vmem:[#allocation2] sm:$0xff] 0.0
    $region17: #{classifier_forward.1} parent=1 // pred_fallthru
      _
    %v21 = vld [vmem:[#allocation2] sm:$0xff]
    %v22 = vld [vmem:[%s0] sm:$0xf]
    %v23 = vld [vmem:[%s1] sm:$0xf]
    %v24 = vld [vmem:[%s1 + $0x4] sm:$0xf]
    %v25 = vld [vmem:[%s1 + $0x8] sm:$0xf]
    %v26 = vld [vmem:[%s1 + $0xc] sm:$0xf]
    %v31 = vunpack.c.l.b16 %v23
    %v32 = vunpack.c.l.b16 %v24
    %v33 = vunpack.c.l.b16 %v25
    %v34 = vunpack.c.l.b16 %v26
    %v35 = vpack.c.b16 %v32, %v31
    %v36 = vpack.c.b16 %v34, %v33
    %vm39 = vcmask 261120
    %v41 = vsel %vm39, %v22, 0
    %43 = vmatprep.subr.bf16.mxu0 0
    %44 = vmatpush1.bf16.msra.mxu0 %v35
    %45 = vmatprep.subr.bf16.mxu0 0
    %46 = vmatpush1.bf16.msra.mxu0 %v36
    %47 = vmatprep.subr.bf16.mxu0 0
    %48 = vmatpush1.bf16.msra.mxu0 0
    %49 = vmatprep.subr.bf16.mxu0 0
    %50 = vmatpush1.bf16.msra.mxu0 0
    %51 = vmatprep.subr.bf16.mxu0 0
    %52 = vmatpush1.bf16.msra.mxu0 0
    %53 = vmatprep.subr.bf16.mxu0 0
    %54 = vmatpush1.bf16.msra.mxu0 0
    %55 = vmatprep.subr.bf16.mxu0 0
    %56 = vmatpush1.bf16.msra.mxu0 0
    %57 = vmatprep.subr.bf16.mxu0 0
    %58 = vmatpush1.bf16.msra.mxu0 0
    %59 = vmatprep.subr.bf16.mxu0 0
    %60 = vmatpush1.bf16.msra.mxu0 0
    %61 = vmatprep.subr.bf16.mxu0 0
    %62 = vmatpush1.bf16.msra.mxu0 0
    %63 = vmatprep.subr.bf16.mxu0 0
    %64 = vmatpush1.bf16.msra.mxu0 0
    %65 = vmatprep.subr.bf16.mxu0 0
    %66 = vmatpush1.bf16.msra.mxu0 0
    %67 = vmatprep.subr.bf16.mxu0 0
    %68 = vmatpush1.bf16.msra.mxu0 0
    %69 = vmatprep.subr.bf16.mxu0 0
    %70 = vmatpush1.bf16.msra.mxu0 0
    %71 = vmatprep.subr.bf16.mxu0 0
    %72 = vmatpush1.bf16.msra.mxu0 0
    %73 = vmatprep.subr.bf16.mxu0 0
    %74 = vmatpush1.bf16.msra.mxu0 0
    %75 = vmatprep.mubr.bf16.mxu0 0
    %76 = vmatmul.mubr.bf16.gmra.mrb[0].mxu0 %v41
    %v77 = vpop.f32.mrb[0].mxu0
    %v78 = vadd.f32 0.0, %v77
    %v79 = vpop.f32.mrb[0].mxu0
    %v80 = vpop.f32.mrb[0].mxu0
    %v81 = vpop.f32.mrb[0].mxu0
    %82 = vdwg.mxu0
    %v83 = vadd.f32 %v21, %v78
    %84 = vst [vmem:[#allocation2] sm:$0xff] %v83
    // Predicated region
    $region18: #{classifier_forward.1} parent=1 // pred_check
      %p85 = pneg %p16
    $region19: #{classifier_forward.1} parent=1 // pred_check_branch
      %87 = sbr.rel (%p85) target = $region21
    $region20: #{classifier_forward.1} parent=1 // pred_region
      %v88 = vld [vmem:[#allocation2] sm:$0xff]
      %v89 = vld [vmem:[%s2] sm:$0x1]
      %v91 = vlaneseq
      %v92 = vshrl.u32 %v91, 7
      %v93 = vsub.s32 0, %v92
      %v94 = vrot.slane %v89, %v93
      %v96 = vadd.f32 %v88, %v94
      %97 = vmax.xlane.f32.xlu0 %v96
      %v98 = vpop.xlane.xlu0 %97
      %v99 = vsub.f32 %v96, %v98
      %v100 = vmul.f32 %v99, 1.442695
      %v101 = vpow.pop %v100
      %102 = vadd.xlane.f32.xlu0 %v101
      %v103 = vpop.xlane.xlu0 %102
      %v104 = vlog2.pop %v103
      %v105 = vmul.f32 %v104, 0.6931472
      %v106 = vsub.f32 %v99, %v105
      %107 = vst [vmem:[#allocation3] sm:$0xff] %v106
    $region21: #{classifier_forward.1} parent=1 // pred_fallthru
      _
    // Predicated region
    $region22: #{classifier_forward.1} parent=1 // pred_check
      _
    $region23: #{classifier_forward.1} parent=1 // pred_check_branch
      %109 = sbr.rel (0) target = $region25
    $region24: #{classifier_forward.1} parent=1 // pred_region
      %s111 = ssub.s32 128, 128
      %112 = vsyncadd [#allocation4], %s111
      %s114 = sshll.u32 [#allocation3], 4
      %s115 = int_to_ptr.vmem [resolvable:$true] %s114
      %117 = dma.vmem_to_hbm [thread:$0]  %s115, 128, %s3, [#allocation4]
    $region25: #{classifier_forward.1} parent=1 // pred_fallthru
      _
    // Predicated region
    $region26: #{classifier_forward.1} parent=1 // pred_check
      _
    $region27: #{classifier_forward.1} parent=1 // pred_check_branch
      %119 = sbr.rel (0) target = $region29
    $region28: #{classifier_forward.1} parent=1 // pred_region
      %120 = dma.done [#allocation4], 128
    $region29: #{classifier_forward.1} parent=1 // pred_fallthru
      _
    %121 = vsyncpa [#allocation4], 1

</llo_original>
